<compile_context>
chip_gen: v7x
topology: tpu7x:2x2x1
jax: 0.10.0
libtpu: 0.0.40
codegen_flags: <defaults>
</compile_context>

<pallas_src>
import functools

import jax
import jax.numpy as jnp
from jax.experimental import pallas as pl
from jax.experimental.pallas import tpu as pltpu

LN_EPS = 1e-5   # nn.LayerNorm default
LANE = 128


def _round_up(x, m):
    return (x + m - 1) // m * m


def _cdiv(a, b):
    return (a + b - 1) // b


def _sublane_rows(dtype):
    # f32 -> 8, bf16 -> 16, int8/fp8 -> 32 (sub-32-bit dtypes pack along sublanes)
    return max(8, 32 // jnp.dtype(dtype).itemsize)


def _layernorm(h, gamma, beta, n_true):
    """Two-pass LayerNorm over the last axis (f32 math).

    `h` may be zero-padded beyond `n_true` columns.  The mean uses the true
    count; for the variance the (h - mu) deviations in padded columns are
    masked to zero (only emitted when padding actually exists).  gamma/beta are
    zero-padded, so padded outputs stay exactly zero.
    """
    n_pad = h.shape[-1]
    inv_n = 1.0 / float(n_true)
    mu = jnp.sum(h, axis=-1, keepdims=True) * inv_n
    d = h - mu
    if n_pad != n_true:
        lane = jax.lax.broadcasted_iota(jnp.int32, (1, n_pad), 1)
        d = jnp.where(lane < n_true, d, 0.0)
    var = jnp.sum(d * d, axis=-1, keepdims=True) * inv_n
    inv = jax.lax.rsqrt(var + LN_EPS)
    return d * inv * gamma + beta


def _mlp_block_kernel(x_ref, wcat_ref, bcat_ref, ln1_ref, w2_ref, p2_ref,
                      o_ref, *, hidden, out_ch, hidden_pad, has_shortcut):
    # ---- fc1 (and, if present, the shortcut Linear fused along the lane axis):
    # a single MXU pass over x; f32 accumulation via preferred_element_type.
    x = x_ref[...]
    lhs = x if x.dtype == wcat_ref.dtype else x.astype(wcat_ref.dtype)
    hc = jnp.dot(lhs, wcat_ref[...], preferred_element_type=jnp.float32)
    hc = hc + bcat_ref[...]

    # ---- LayerNorm1 + ReLU (stats over the true hidden width)
    h = hc[:, :hidden_pad]
    h = _layernorm(h, ln1_ref[0:1, :], ln1_ref[1:2, :], hidden)
    h = jnp.maximum(h, 0.0)

    # ---- fc2 + LayerNorm2
    y = jnp.dot(h.astype(w2_ref.dtype), w2_ref[...],
                preferred_element_type=jnp.float32)
    y = y + p2_ref[0:1, :]
    y = _layernorm(y, p2_ref[1:2, :], p2_ref[2:3, :], out_ch)

    # ---- residual + ReLU
    if has_shortcut:
        sc = hc[:, hidden_pad:]          # shortcut Linear output (fused above)
    else:
        sc = x.astype(jnp.float32)       # nn.Identity: no matmul at all
    o_ref[...] = jnp.maximum(y + sc, 0.0).astype(o_ref.dtype)


def pack_params(params, param_dtype=None):
    """Pad feature dims to multiples of 128 and pack/fuse the parameters.

    params = (w1[Cin,H], b1[1,H], g1[1,H], be1[1,H],
              w2[H,Cout], b2[1,Cout], g2[1,Cout], be2[1,Cout],
              ws[Cin,Cout] or None, bs[1,Cout] or None)

    param_dtype (e.g. jnp.bfloat16) casts only the matmul weights; biases and
    LayerNorm parameters stay f32 (they are added to f32 accumulators).
    """
    (w1, b1, g1, be1, w2, b2, g2, be2, ws, bs) = params
    Cin, H = w1.shape
    Cout = w2.shape[1]
    has_shortcut = ws is not None

    Cin_p = _round_up(Cin, LANE)
    Hp = _round_up(H, LANE)
    Cout_p = _round_up(Cout, LANE)

    def pad2(a, r, c):
        a = a.reshape((-1, a.shape[-1]))
        return jnp.pad(a, ((0, r - a.shape[0]), (0, c - a.shape[1])))

    w1p = pad2(w1, Cin_p, Hp)
    b1p = pad2(b1, 1, Hp)
    if has_shortcut:
        w_cat = jnp.concatenate([w1p, pad2(ws, Cin_p, Cout_p)], axis=1)
        b_cat = jnp.concatenate([b1p, pad2(bs, 1, Cout_p)], axis=1)
    else:
        assert Cin == Cout, "identity shortcut requires in_channels == out_channels"
        w_cat, b_cat = w1p, b1p

    ln1 = jnp.concatenate([pad2(g1, 1, Hp), pad2(be1, 1, Hp)], axis=0)          # (2, Hp)
    w2p = pad2(w2, Hp, Cout_p)
    p2n = jnp.concatenate([pad2(b2, 1, Cout_p), pad2(g2, 1, Cout_p),
                           pad2(be2, 1, Cout_p)], axis=0)                       # (3, Cout_p)

    if param_dtype is not None:
        w_cat = w_cat.astype(param_dtype)
        w2p = w2p.astype(param_dtype)

    b_cat = b_cat.astype(jnp.float32)
    ln1 = ln1.astype(jnp.float32)
    p2n = p2n.astype(jnp.float32)

    meta = dict(Cin=Cin, H=H, Cout=Cout,
                Cin_p=Cin_p, Hp=Hp, Cout_p=Cout_p,
                has_shortcut=has_shortcut)
    return (w_cat, b_cat, ln1, w2p, p2n), meta


def _choose_row_tile(B, tm_max, sublane):
    """Balanced row tile: minimal padding, sublane-aligned, >=2 steps when B>64
    so v7x's two TensorCores both get a 'parallel' grid slice."""
    n = _cdiv(B, tm_max)
    if n == 1 and B > 64:
        n = 2
    tm = _round_up(_cdiv(B, n), sublane)
    return min(tm, _round_up(B, sublane))


def feature_residual_mlp_block(x, packed, meta, *, tm=256):
    """x: [B, Cin] -> [B, Cout]."""
    w_cat, b_cat, ln1, w2p, p2n = packed
    B, Cin = x.shape
    assert Cin == meta["Cin"]
    Cin_p, Hp, Cout_p, Cout = meta["Cin_p"], meta["Hp"], meta["Cout_p"], meta["Cout"]
    Wn = w_cat.shape[1]

    sub = _sublane_rows(x.dtype)
    tm_eff = _choose_row_tile(B, tm, sub)

    # ---- VMEM budget: double-buffered x/out tiles, resident params, and the
    # in-kernel f32 intermediates (hc, h + its low-precision cast, y, sc).
    x_bytes = x.dtype.itemsize
    param_bytes = sum(int(a.size) * a.dtype.itemsize
                      for a in (w_cat, b_cat, ln1, w2p, p2n))
    try:
        phys_vmem = pltpu.get_tpu_info().vmem_capacity_bytes
    except Exception:
        phys_vmem = 64 * 2**20          # conservative (v7x per-TC)

    def footprint(rows, param_buffers):
        io = 2 * rows * (Cin_p + Cout_p) * x_bytes
        interm = rows * (Wn + 2 * Hp + 2 * Cout_p) * 4
        return io + param_buffers * param_bytes + interm

    budget = int(0.6 * phys_vmem)
    while footprint(tm_eff, 2) > budget and tm_eff > sub:
        tm_eff = max(sub, _round_up(tm_eff // 2, sub))

    vmem_limit = int(min(int(0.9 * phys_vmem),
                         max(32 * 2**20, 2 * footprint(tm_eff, 2))))

    grid_m = _cdiv(B, tm_eff)

    # Only the channel pad of x is materialized (padded K columns must be
    # exactly zero).  No row pad: Pallas masks the partial last row block.
    xp = x if Cin_p == Cin else jnp.pad(x, ((0, 0), (0, Cin_p - Cin)))

    kernel = functools.partial(
        _mlp_block_kernel,
        hidden=meta["H"], out_ch=Cout, hidden_pad=Hp,
        has_shortcut=meta["has_shortcut"])

    def build(single_buffer_params):
        def const(shape):
            # Constant block index across the row grid: fetched once.  With
            # Buffered(1) it is also single-buffered (half the resident VMEM).
            if single_buffer_params:
                return pl.BlockSpec(shape, lambda i: (0, 0),
                                    pipeline_mode=pl.Buffered(1))
            return pl.BlockSpec(shape, lambda i: (0, 0))

        return pl.pallas_call(
            kernel,
            out_shape=jax.ShapeDtypeStruct((B, Cout_p), x.dtype),
            grid_spec=pltpu.PrefetchScalarGridSpec(
                num_scalar_prefetch=0,
                grid=(grid_m,),
                in_specs=[
                    pl.BlockSpec((tm_eff, Cin_p), lambda i: (i, 0)),   # x rows
                    const((Cin_p, Wn)),        # fused [w1 | ws]
                    const((1, Wn)),            # fused [b1 | bs]
                    const((2, Hp)),            # [gamma1; beta1]
                    const((Hp, Cout_p)),       # w2
                    const((3, Cout_p)),        # [b2; gamma2; beta2]
                ],
                out_specs=pl.BlockSpec((tm_eff, Cout_p), lambda i: (i, 0)),
            ),
            compiler_params=pltpu.CompilerParams(
                dimension_semantics=("parallel",),
                vmem_limit_bytes=vmem_limit),
        )

    args = (xp, w_cat, b_cat, ln1, w2p, p2n)
    try:
        out = build(True)(*args)
    except Exception:
        # Fallback if this JAX build rejects pipeline_mode / Buffered(1).
        out = build(False)(*args)

    return out if Cout_p == Cout else out[:, :Cout]


# ----------------------------------------------------------------------------
# Parameter init mimicking nn.Linear / nn.LayerNorm, and a pure-JAX reference.
# ----------------------------------------------------------------------------
def init_params(key, in_channels, hidden_channels, out_channels):
    k1, k2, k3, k4, k5, k6 = jax.random.split(key, 6)
    f32 = jnp.float32

    def linear(kw, kb, fan_in, fan_out):
        bound = 1.0 / jnp.sqrt(fan_in)
        w = jax.random.uniform(kw, (fan_in, fan_out), f32, -bound, bound)
        b = jax.random.uniform(kb, (1, fan_out), f32, -bound, bound)
        return w, b

    w1, b1 = linear(k1, k2, in_channels, hidden_channels)
    g1 = jnp.ones((1, hidden_channels), f32)
    be1 = jnp.zeros((1, hidden_channels), f32)

    w2, b2 = linear(k3, k4, hidden_channels, out_channels)
    g2 = jnp.ones((1, out_channels), f32)
    be2 = jnp.zeros((1, out_channels), f32)

    if in_channels != out_channels:
        ws, bs = linear(k5, k6, in_channels, out_channels)
    else:
        ws, bs = None, None   # nn.Identity shortcut

    return (w1, b1, g1, be1, w2, b2, g2, be2, ws, bs)


def quantize_weights(params, dtype):
    """Round the matmul weights through `dtype` (for fair bf16 comparisons)."""
    (w1, b1, g1, be1, w2, b2, g2, be2, ws, bs) = params
    q = lambda a: None if a is None else a.astype(dtype).astype(jnp.float32)
    return (q(w1), b1, g1, be1, q(w2), b2, g2, be2, q(ws), bs)


def reference(x, params):
    (w1, b1, g1, be1, w2, b2, g2, be2, ws, bs) = params
    x = x.astype(jnp.float32)

    def ln(h, g, b):
        mu = jnp.mean(h, axis=-1, keepdims=True)
        var = jnp.mean((h - mu) ** 2, axis=-1, keepdims=True)
        return (h - mu) * jax.lax.rsqrt(var + LN_EPS) * g + b

    h = jnp.maximum(ln(x @ w1 + b1, g1, be1), 0.0)
    y = ln(h @ w2 + b2, g2, be2)
    sc = x if ws is None else x @ ws + bs
    return jnp.maximum(y + sc, 0.0)


if __name__ == "__main__":
    key = jax.random.PRNGKey(0)
    k1, k2, k3, k4, k5, k6 = jax.random.split(key, 6)

    # Case 1: in_channels != out_channels -> shortcut Linear fused into fc1.
    B1, Cin1, H1, Cout1 = 16, 16, 32, 24
    x1 = jax.random.normal(k1, (B1, Cin1), jnp.float32)
    params1 = init_params(k2, Cin1, H1, Cout1)
    packed1, meta1 = pack_params(params1)
    out1 = jax.block_until_ready(feature_residual_mlp_block(x1, packed1, meta1))
    ref1 = reference(x1, params1)
    assert out1.shape == (B1, Cout1)
    assert jnp.allclose(out1, ref1, atol=1e-4, rtol=1e-4)

    # Case 2: identity shortcut, ragged batch (300 rows) -> balanced row tiling
    # (2 steps of 152 rows) with a masked partial last block, no row pad copy.
    B2, Cin2, H2 = 300, 32, 48
    x2 = jax.random.normal(k3, (B2, Cin2), jnp.float32)
    params2 = init_params(k4, Cin2, H2, Cin2)
    packed2, meta2 = pack_params(params2)
    out2 = jax.block_until_ready(
        feature_residual_mlp_block(x2, packed2, meta2, tm=256))
    ref2 = reference(x2, params2)
    assert out2.shape == (B2, Cin2)
    assert jnp.allclose(out2, ref2, atol=1e-4, rtol=1e-4)

    # Case 3: bf16 weights (MXU low-precision path), B=128 forces the >=2-step
    # split of the parallel row grid even though a single 256-row tile would fit.
    B3, Cin3, H3 = 128, 64, 128
    x3 = jax.random.normal(k5, (B3, Cin3), jnp.float32)
    params3 = init_params(k6, Cin3, H3, Cin3)
    packed3, meta3 = pack_params(params3, param_dtype=jnp.bfloat16)
    out3 = jax.block_until_ready(
        feature_residual_mlp_block(x3, packed3, meta3, tm=256))
    ref3 = reference(x3, quantize_weights(params3, jnp.bfloat16))
    assert out3.shape == (B3, Cin3)
    assert jnp.allclose(out3, ref3, atol=5e-2, rtol=5e-2)

    print("KERNEL_OK")
</pallas_src>

<mosaic_0001>
module attributes {stable_mosaic.version = 11 : i64} {
  func.func @_mlp_block_kernel(%arg0: i32, %arg1: memref<16x128xf32, #tpu.memory_space<vmem>>, %arg2: memref<128x256xf32, #tpu.memory_space<vmem>>, %arg3: memref<1x256xf32, #tpu.memory_space<vmem>>, %arg4: memref<2x128xf32, #tpu.memory_space<vmem>>, %arg5: memref<128x128xf32, #tpu.memory_space<vmem>>, %arg6: memref<3x128xf32, #tpu.memory_space<vmem>>, %arg7: memref<16x128xf32, #tpu.memory_space<vmem>>) attributes {dimension_semantics = [#tpu.dimension_semantics<parallel>], iteration_bounds = array<i64: 1>, scalar_prefetch = 0 : i64, scratch_operands = 0 : i64, tpu.core_type = #tpu.core_type<tc>, window_params = [{transform_indices = @transform_0, window_bounds = array<i64: 16, 128>}, {pipeline_mode = #tpu.pipeline_mode<synchronous>, transform_indices = @transform_1, window_bounds = array<i64: 128, 256>}, {pipeline_mode = #tpu.pipeline_mode<synchronous>, transform_indices = @transform_2, window_bounds = array<i64: 1, 256>}, {pipeline_mode = #tpu.pipeline_mode<synchronous>, transform_indices = @transform_3, window_bounds = array<i64: 2, 128>}, {pipeline_mode = #tpu.pipeline_mode<synchronous>, transform_indices = @transform_4, window_bounds = array<i64: 128, 128>}, {pipeline_mode = #tpu.pipeline_mode<synchronous>, transform_indices = @transform_5, window_bounds = array<i64: 3, 128>}, {transform_indices = @transform_6, window_bounds = array<i64: 16, 128>}]} {
    %c0 = arith.constant 0 : index
    %c0_0 = arith.constant 0 : index
    %0 = vector.load %arg1[%c0, %c0_0] : memref<16x128xf32, #tpu.memory_space<vmem>>, vector<16x128xf32>
    %c0_1 = arith.constant 0 : index
    %c0_2 = arith.constant 0 : index
    %1 = vector.load %arg2[%c0_1, %c0_2] : memref<128x256xf32, #tpu.memory_space<vmem>>, vector<128x256xf32>
    %cst = arith.constant dense<0.000000e+00> : vector<16x256xf32>
    %2 = tpu.matmul %0, %1, %cst {dimension_numbers = #tpu.dot_dimension_numbers<[1], [0], [0], [1], [0, 0, 1, 1], [], []>} : vector<16x128xf32>, vector<128x256xf32>, vector<16x256xf32> -> vector<16x256xf32>
    %c0_3 = arith.constant 0 : index
    %c0_4 = arith.constant 0 : index
    %3 = vector.load %arg3[%c0_3, %c0_4] : memref<1x256xf32, #tpu.memory_space<vmem>>, vector<1x256xf32>
    %4 = vector.broadcast %3 : vector<1x256xf32> to vector<16x256xf32>
    %5 = arith.addf %2, %4 : vector<16x256xf32>
    %6 = vector.extract_strided_slice %5 {offsets = [0, 0], sizes = [16, 128], strides = [1, 1]} : vector<16x256xf32> to vector<16x128xf32>
    %c0_5 = arith.constant 0 : index
    %c0_6 = arith.constant 0 : index
    %7 = vector.load %arg4[%c0_5, %c0_6] : memref<2x128xf32, #tpu.memory_space<vmem>>, vector<1x128xf32>
    %c1 = arith.constant 1 : index
    %c0_7 = arith.constant 0 : index
    %8 = vector.load %arg4[%c1, %c0_7] : memref<2x128xf32, #tpu.memory_space<vmem>>, vector<1x128xf32>
    %cst_8 = arith.constant dense<0.000000e+00> : vector<16xf32>
    %9 = vector.multi_reduction <add>, %6, %cst_8 [1] : vector<16x128xf32> to vector<16xf32>
    %10 = vector.shape_cast %9 : vector<16xf32> to vector<16x1xf32>
    %cst_9 = arith.constant 3.125000e-02 : f32
    %11 = vector.broadcast %cst_9 : f32 to vector<16x1xf32>
    %12 = arith.mulf %10, %11 : vector<16x1xf32>
    %13 = vector.broadcast %12 : vector<16x1xf32> to vector<16x128xf32>
    %14 = arith.subf %6, %13 : vector<16x128xf32>
    %15 = tpu.iota {dimensions = array<i32: 1>} : vector<1x128xi32>
    %c32_i32 = arith.constant 32 : i32
    %16 = vector.broadcast %c32_i32 : i32 to vector<1x128xi32>
    %17 = arith.cmpi slt, %15, %16 : vector<1x128xi32>
    %cst_10 = arith.constant 0.000000e+00 : f32
    %18 = vector.shape_cast %17 : vector<1x128xi1> to vector<1x128xi1>
    %19 = vector.broadcast %18 : vector<1x128xi1> to vector<16x128xi1>
    %20 = vector.broadcast %cst_10 : f32 to vector<16x128xf32>
    %21 = arith.select %19, %14, %20 : vector<16x128xi1>, vector<16x128xf32>
    %22 = arith.mulf %21, %21 : vector<16x128xf32>
    %cst_11 = arith.constant dense<0.000000e+00> : vector<16xf32>
    %23 = vector.multi_reduction <add>, %22, %cst_11 [1] : vector<16x128xf32> to vector<16xf32>
    %24 = vector.shape_cast %23 : vector<16xf32> to vector<16x1xf32>
    %cst_12 = arith.constant 3.125000e-02 : f32
    %25 = vector.broadcast %cst_12 : f32 to vector<16x1xf32>
    %26 = arith.mulf %24, %25 : vector<16x1xf32>
    %cst_13 = arith.constant 9.99999974E-6 : f32
    %27 = vector.broadcast %cst_13 : f32 to vector<16x1xf32>
    %28 = arith.addf %26, %27 : vector<16x1xf32>
    %29 = math.rsqrt %28 : vector<16x1xf32>
    %30 = vector.broadcast %29 : vector<16x1xf32> to vector<16x128xf32>
    %31 = arith.mulf %21, %30 : vector<16x128xf32>
    %32 = vector.broadcast %7 : vector<1x128xf32> to vector<16x128xf32>
    %33 = arith.mulf %31, %32 : vector<16x128xf32>
    %34 = vector.broadcast %8 : vector<1x128xf32> to vector<16x128xf32>
    %35 = arith.addf %33, %34 : vector<16x128xf32>
    %cst_14 = arith.constant 0.000000e+00 : f32
    %36 = vector.broadcast %cst_14 : f32 to vector<16x128xf32>
    %37 = arith.maximumf %35, %36 : vector<16x128xf32>
    %c0_15 = arith.constant 0 : index
    %c0_16 = arith.constant 0 : index
    %38 = vector.load %arg5[%c0_15, %c0_16] : memref<128x128xf32, #tpu.memory_space<vmem>>, vector<128x128xf32>
    %cst_17 = arith.constant dense<0.000000e+00> : vector<16x128xf32>
    %39 = tpu.matmul %37, %38, %cst_17 {dimension_numbers = #tpu.dot_dimension_numbers<[1], [0], [0], [1], [0, 0, 1, 1], [], []>} : vector<16x128xf32>, vector<128x128xf32>, vector<16x128xf32> -> vector<16x128xf32>
    %c0_18 = arith.constant 0 : index
    %c0_19 = arith.constant 0 : index
    %40 = vector.load %arg6[%c0_18, %c0_19] : memref<3x128xf32, #tpu.memory_space<vmem>>, vector<1x128xf32>
    %41 = vector.broadcast %40 : vector<1x128xf32> to vector<16x128xf32>
    %42 = arith.addf %39, %41 : vector<16x128xf32>
    %c1_20 = arith.constant 1 : index
    %c0_21 = arith.constant 0 : index
    %43 = vector.load %arg6[%c1_20, %c0_21] : memref<3x128xf32, #tpu.memory_space<vmem>>, vector<1x128xf32>
    %c2 = arith.constant 2 : index
    %c0_22 = arith.constant 0 : index
    %44 = vector.load %arg6[%c2, %c0_22] : memref<3x128xf32, #tpu.memory_space<vmem>>, vector<1x128xf32>
    %cst_23 = arith.constant dense<0.000000e+00> : vector<16xf32>
    %45 = vector.multi_reduction <add>, %42, %cst_23 [1] : vector<16x128xf32> to vector<16xf32>
    %46 = vector.shape_cast %45 : vector<16xf32> to vector<16x1xf32>
    %cst_24 = arith.constant 0.0416666679 : f32
    %47 = vector.broadcast %cst_24 : f32 to vector<16x1xf32>
    %48 = arith.mulf %46, %47 : vector<16x1xf32>
    %49 = vector.broadcast %48 : vector<16x1xf32> to vector<16x128xf32>
    %50 = arith.subf %42, %49 : vector<16x128xf32>
    %51 = tpu.iota {dimensions = array<i32: 1>} : vector<1x128xi32>
    %c24_i32 = arith.constant 24 : i32
    %52 = vector.broadcast %c24_i32 : i32 to vector<1x128xi32>
    %53 = arith.cmpi slt, %51, %52 : vector<1x128xi32>
    %cst_25 = arith.constant 0.000000e+00 : f32
    %54 = vector.shape_cast %53 : vector<1x128xi1> to vector<1x128xi1>
    %55 = vector.broadcast %54 : vector<1x128xi1> to vector<16x128xi1>
    %56 = vector.broadcast %cst_25 : f32 to vector<16x128xf32>
    %57 = arith.select %55, %50, %56 : vector<16x128xi1>, vector<16x128xf32>
    %58 = arith.mulf %57, %57 : vector<16x128xf32>
    %cst_26 = arith.constant dense<0.000000e+00> : vector<16xf32>
    %59 = vector.multi_reduction <add>, %58, %cst_26 [1] : vector<16x128xf32> to vector<16xf32>
    %60 = vector.shape_cast %59 : vector<16xf32> to vector<16x1xf32>
    %cst_27 = arith.constant 0.0416666679 : f32
    %61 = vector.broadcast %cst_27 : f32 to vector<16x1xf32>
    %62 = arith.mulf %60, %61 : vector<16x1xf32>
    %cst_28 = arith.constant 9.99999974E-6 : f32
    %63 = vector.broadcast %cst_28 : f32 to vector<16x1xf32>
    %64 = arith.addf %62, %63 : vector<16x1xf32>
    %65 = math.rsqrt %64 : vector<16x1xf32>
    %66 = vector.broadcast %65 : vector<16x1xf32> to vector<16x128xf32>
    %67 = arith.mulf %57, %66 : vector<16x128xf32>
    %68 = vector.broadcast %43 : vector<1x128xf32> to vector<16x128xf32>
    %69 = arith.mulf %67, %68 : vector<16x128xf32>
    %70 = vector.broadcast %44 : vector<1x128xf32> to vector<16x128xf32>
    %71 = arith.addf %69, %70 : vector<16x128xf32>
    %72 = vector.extract_strided_slice %5 {offsets = [0, 128], sizes = [16, 128], strides = [1, 1]} : vector<16x256xf32> to vector<16x128xf32>
    %73 = arith.addf %71, %72 : vector<16x128xf32>
    %cst_29 = arith.constant 0.000000e+00 : f32
    %74 = vector.broadcast %cst_29 : f32 to vector<16x128xf32>
    %75 = arith.maximumf %73, %74 : vector<16x128xf32>
    %c0_30 = arith.constant 0 : index
    %c0_31 = arith.constant 0 : index
    %76 = vector.load %arg7[%c0_30, %c0_31] : memref<16x128xf32, #tpu.memory_space<vmem>>, vector<16x128xf32>
    tpu.vector_store %arg7[%c0_30, %c0_31], %75 {strides = array<i32>} : memref<16x128xf32, #tpu.memory_space<vmem>>, vector<16x128xf32>,
    return
  }
  func.func @transform_0(%arg0: i32) -> (i32, i32) {
    %c0_i32 = arith.constant 0 : i32
    %c0_i32_0 = arith.constant 0 : i32
    return %arg0, %c0_i32 : i32, i32
  }
  func.func @transform_1(%arg0: i32) -> (i32, i32) {
    %c0_i32 = arith.constant 0 : i32
    %c0_i32_0 = arith.constant 0 : i32
    %c0_i32_1 = arith.constant 0 : i32
    return %c0_i32, %c0_i32_0 : i32, i32
  }
  func.func @transform_2(%arg0: i32) -> (i32, i32) {
    %c0_i32 = arith.constant 0 : i32
    %c0_i32_0 = arith.constant 0 : i32
    %c0_i32_1 = arith.constant 0 : i32
    return %c0_i32, %c0_i32_0 : i32, i32
  }
  func.func @transform_3(%arg0: i32) -> (i32, i32) {
    %c0_i32 = arith.constant 0 : i32
    %c0_i32_0 = arith.constant 0 : i32
    %c0_i32_1 = arith.constant 0 : i32
    return %c0_i32, %c0_i32_0 : i32, i32
  }
  func.func @transform_4(%arg0: i32) -> (i32, i32) {
    %c0_i32 = arith.constant 0 : i32
    %c0_i32_0 = arith.constant 0 : i32
    %c0_i32_1 = arith.constant 0 : i32
    return %c0_i32, %c0_i32_0 : i32, i32
  }
  func.func @transform_5(%arg0: i32) -> (i32, i32) {
    %c0_i32 = arith.constant 0 : i32
    %c0_i32_0 = arith.constant 0 : i32
    %c0_i32_1 = arith.constant 0 : i32
    return %c0_i32, %c0_i32_0 : i32, i32
  }
  func.func @transform_6(%arg0: i32) -> (i32, i32) {
    %c0_i32 = arith.constant 0 : i32
    %c0_i32_0 = arith.constant 0 : i32
    return %arg0, %c0_i32 : i32, i32
  }
}

module attributes {stable_mosaic.version = 11 : i64} {
  func.func @_mlp_block_kernel(%arg0: i32, %arg1: memref<16x128xf32, #tpu.memory_space<vmem>>, %arg2: memref<128x256xf32, #tpu.memory_space<vmem>>, %arg3: memref<1x256xf32, #tpu.memory_space<vmem>>, %arg4: memref<2x128xf32, #tpu.memory_space<vmem>>, %arg5: memref<128x128xf32, #tpu.memory_space<vmem>>, %arg6: memref<3x128xf32, #tpu.memory_space<vmem>>, %arg7: memref<16x128xf32, #tpu.memory_space<vmem>>) attributes {dimension_semantics = [#tpu.dimension_semantics<parallel>], iteration_bounds = array<i64: 1>, scalar_prefetch = 0 : i64, scratch_operands = 0 : i64, tpu.core_type = #tpu.core_type<tc>, window_params = [{transform_indices = @transform_0, window_bounds = array<i64: 16, 128>}, {pipeline_mode = #tpu.pipeline_mode<synchronous>, transform_indices = @transform_1, window_bounds = array<i64: 128, 256>}, {pipeline_mode = #tpu.pipeline_mode<synchronous>, transform_indices = @transform_2, window_bounds = array<i64: 1, 256>}, {pipeline_mode = #tpu.pipeline_mode<synchronous>, transform_indices = @transform_3, window_bounds = array<i64: 2, 128>}, {pipeline_mode = #tpu.pipeline_mode<synchronous>, transform_indices = @transform_4, window_bounds = array<i64: 128, 128>}, {pipeline_mode = #tpu.pipeline_mode<synchronous>, transform_indices = @transform_5, window_bounds = array<i64: 3, 128>}, {transform_indices = @transform_6, window_bounds = array<i64: 16, 128>}]} {
    %c0 = arith.constant 0 : index
    %c0_0 = arith.constant 0 : index
    %0 = vector.load %arg1[%c0, %c0_0] : memref<16x128xf32, #tpu.memory_space<vmem>>, vector<16x128xf32>
    %c0_1 = arith.constant 0 : index
    %c0_2 = arith.constant 0 : index
    %1 = vector.load %arg2[%c0_1, %c0_2] : memref<128x256xf32, #tpu.memory_space<vmem>>, vector<128x256xf32>
    %cst = arith.constant dense<0.000000e+00> : vector<16x256xf32>
    %2 = tpu.matmul %0, %1, %cst {dimension_numbers = #tpu.dot_dimension_numbers<[1], [0], [0], [1], [0, 0, 1, 1], [], []>} : vector<16x128xf32>, vector<128x256xf32>, vector<16x256xf32> -> vector<16x256xf32>
    %c0_3 = arith.constant 0 : index
    %c0_4 = arith.constant 0 : index
    %3 = vector.load %arg3[%c0_3, %c0_4] : memref<1x256xf32, #tpu.memory_space<vmem>>, vector<1x256xf32>
    %4 = vector.broadcast %3 : vector<1x256xf32> to vector<16x256xf32>
    %5 = arith.addf %2, %4 : vector<16x256xf32>
    %6 = vector.extract_strided_slice %5 {offsets = [0, 0], sizes = [16, 128], strides = [1, 1]} : vector<16x256xf32> to vector<16x128xf32>
    %c0_5 = arith.constant 0 : index
    %c0_6 = arith.constant 0 : index
    %7 = vector.load %arg4[%c0_5, %c0_6] : memref<2x128xf32, #tpu.memory_space<vmem>>, vector<1x128xf32>
    %c1 = arith.constant 1 : index
    %c0_7 = arith.constant 0 : index
    %8 = vector.load %arg4[%c1, %c0_7] : memref<2x128xf32, #tpu.memory_space<vmem>>, vector<1x128xf32>
    %cst_8 = arith.constant dense<0.000000e+00> : vector<16xf32>
    %9 = vector.multi_reduction <add>, %6, %cst_8 [1] : vector<16x128xf32> to vector<16xf32>
    %10 = vector.shape_cast %9 : vector<16xf32> to vector<16x1xf32>
    %cst_9 = arith.constant 3.125000e-02 : f32
    %11 = vector.broadcast %cst_9 : f32 to vector<16x1xf32>
    %12 = arith.mulf %10, %11 : vector<16x1xf32>
    %13 = vector.broadcast %12 : vector<16x1xf32> to vector<16x128xf32>
    %14 = arith.subf %6, %13 : vector<16x128xf32>
    %15 = tpu.iota {dimensions = array<i32: 1>} : vector<1x128xi32>
    %c32_i32 = arith.constant 32 : i32
    %16 = vector.broadcast %c32_i32 : i32 to vector<1x128xi32>
    %17 = arith.cmpi slt, %15, %16 : vector<1x128xi32>
    %cst_10 = arith.constant 0.000000e+00 : f32
    %18 = vector.shape_cast %17 : vector<1x128xi1> to vector<1x128xi1>
    %19 = vector.broadcast %18 : vector<1x128xi1> to vector<16x128xi1>
    %20 = vector.broadcast %cst_10 : f32 to vector<16x128xf32>
    %21 = arith.select %19, %14, %20 : vector<16x128xi1>, vector<16x128xf32>
    %22 = arith.mulf %21, %21 : vector<16x128xf32>
    %cst_11 = arith.constant dense<0.000000e+00> : vector<16xf32>
    %23 = vector.multi_reduction <add>, %22, %cst_11 [1] : vector<16x128xf32> to vector<16xf32>
    %24 = vector.shape_cast %23 : vector<16xf32> to vector<16x1xf32>
    %cst_12 = arith.constant 3.125000e-02 : f32
    %25 = vector.broadcast %cst_12 : f32 to vector<16x1xf32>
    %26 = arith.mulf %24, %25 : vector<16x1xf32>
    %cst_13 = arith.constant 9.99999974E-6 : f32
    %27 = vector.broadcast %cst_13 : f32 to vector<16x1xf32>
    %28 = arith.addf %26, %27 : vector<16x1xf32>
    %29 = math.rsqrt %28 : vector<16x1xf32>
    %30 = vector.broadcast %29 : vector<16x1xf32> to vector<16x128xf32>
    %31 = arith.mulf %21, %30 : vector<16x128xf32>
    %32 = vector.broadcast %7 : vector<1x128xf32> to vector<16x128xf32>
    %33 = arith.mulf %31, %32 : vector<16x128xf32>
    %34 = vector.broadcast %8 : vector<1x128xf32> to vector<16x128xf32>
    %35 = arith.addf %33, %34 : vector<16x128xf32>
    %cst_14 = arith.constant 0.000000e+00 : f32
    %36 = vector.broadcast %cst_14 : f32 to vector<16x128xf32>
    %37 = arith.maximumf %35, %36 : vector<16x128xf32>
    %c0_15 = arith.constant 0 : index
    %c0_16 = arith.constant 0 : index
    %38 = vector.load %arg5[%c0_15, %c0_16] : memref<128x128xf32, #tpu.memory_space<vmem>>, vector<128x128xf32>
    %cst_17 = arith.constant dense<0.000000e+00> : vector<16x128xf32>
    %39 = tpu.matmul %37, %38, %cst_17 {dimension_numbers = #tpu.dot_dimension_numbers<[1], [0], [0], [1], [0, 0, 1, 1], [], []>} : vector<16x128xf32>, vector<128x128xf32>, vector<16x128xf32> -> vector<16x128xf32>
    %c0_18 = arith.constant 0 : index
    %c0_19 = arith.constant 0 : index
    %40 = vector.load %arg6[%c0_18, %c0_19] : memref<3x128xf32, #tpu.memory_space<vmem>>, vector<1x128xf32>
    %41 = vector.broadcast %40 : vector<1x128xf32> to vector<16x128xf32>
    %42 = arith.addf %39, %41 : vector<16x128xf32>
    %c1_20 = arith.constant 1 : index
    %c0_21 = arith.constant 0 : index
    %43 = vector.load %arg6[%c1_20, %c0_21] : memref<3x128xf32, #tpu.memory_space<vmem>>, vector<1x128xf32>
    %c2 = arith.constant 2 : index
    %c0_22 = arith.constant 0 : index
    %44 = vector.load %arg6[%c2, %c0_22] : memref<3x128xf32, #tpu.memory_space<vmem>>, vector<1x128xf32>
    %cst_23 = arith.constant dense<0.000000e+00> : vector<16xf32>
    %45 = vector.multi_reduction <add>, %42, %cst_23 [1] : vector<16x128xf32> to vector<16xf32>
    %46 = vector.shape_cast %45 : vector<16xf32> to vector<16x1xf32>
    %cst_24 = arith.constant 0.0416666679 : f32
    %47 = vector.broadcast %cst_24 : f32 to vector<16x1xf32>
    %48 = arith.mulf %46, %47 : vector<16x1xf32>
    %49 = vector.broadcast %48 : vector<16x1xf32> to vector<16x128xf32>
    %50 = arith.subf %42, %49 : vector<16x128xf32>
    %51 = tpu.iota {dimensions = array<i32: 1>} : vector<1x128xi32>
    %c24_i32 = arith.constant 24 : i32
    %52 = vector.broadcast %c24_i32 : i32 to vector<1x128xi32>
    %53 = arith.cmpi slt, %51, %52 : vector<1x128xi32>
    %cst_25 = arith.constant 0.000000e+00 : f32
    %54 = vector.shape_cast %53 : vector<1x128xi1> to vector<1x128xi1>
    %55 = vector.broadcast %54 : vector<1x128xi1> to vector<16x128xi1>
    %56 = vector.broadcast %cst_25 : f32 to vector<16x128xf32>
    %57 = arith.select %55, %50, %56 : vector<16x128xi1>, vector<16x128xf32>
    %58 = arith.mulf %57, %57 : vector<16x128xf32>
    %cst_26 = arith.constant dense<0.000000e+00> : vector<16xf32>
    %59 = vector.multi_reduction <add>, %58, %cst_26 [1] : vector<16x128xf32> to vector<16xf32>
    %60 = vector.shape_cast %59 : vector<16xf32> to vector<16x1xf32>
    %cst_27 = arith.constant 0.0416666679 : f32
    %61 = vector.broadcast %cst_27 : f32 to vector<16x1xf32>
    %62 = arith.mulf %60, %61 : vector<16x1xf32>
    %cst_28 = arith.constant 9.99999974E-6 : f32
    %63 = vector.broadcast %cst_28 : f32 to vector<16x1xf32>
    %64 = arith.addf %62, %63 : vector<16x1xf32>
    %65 = math.rsqrt %64 : vector<16x1xf32>
    %66 = vector.broadcast %65 : vector<16x1xf32> to vector<16x128xf32>
    %67 = arith.mulf %57, %66 : vector<16x128xf32>
    %68 = vector.broadcast %43 : vector<1x128xf32> to vector<16x128xf32>
    %69 = arith.mulf %67, %68 : vector<16x128xf32>
    %70 = vector.broadcast %44 : vector<1x128xf32> to vector<16x128xf32>
    %71 = arith.addf %69, %70 : vector<16x128xf32>
    %72 = vector.extract_strided_slice %5 {offsets = [0, 128], sizes = [16, 128], strides = [1, 1]} : vector<16x256xf32> to vector<16x128xf32>
    %73 = arith.addf %71, %72 : vector<16x128xf32>
    %cst_29 = arith.constant 0.000000e+00 : f32
    %74 = vector.broadcast %cst_29 : f32 to vector<16x128xf32>
    %75 = arith.maximumf %73, %74 : vector<16x128xf32>
    %c0_30 = arith.constant 0 : index
    %c0_31 = arith.constant 0 : index
    %76 = vector.load %arg7[%c0_30, %c0_31] : memref<16x128xf32, #tpu.memory_space<vmem>>, vector<16x128xf32>
    tpu.vector_store %arg7[%c0_30, %c0_31], %75 {strides = array<i32>} : memref<16x128xf32, #tpu.memory_space<vmem>>, vector<16x128xf32>,
    return
  }
  func.func @transform_0(%arg0: i32) -> (i32, i32) {
    %c0_i32 = arith.constant 0 : i32
    %c0_i32_0 = arith.constant 0 : i32
    return %arg0, %c0_i32 : i32, i32
  }
  func.func @transform_1(%arg0: i32) -> (i32, i32) {
    %c0_i32 = arith.constant 0 : i32
    %c0_i32_0 = arith.constant 0 : i32
    %c0_i32_1 = arith.constant 0 : i32
    return %c0_i32, %c0_i32_0 : i32, i32
  }
  func.func @transform_2(%arg0: i32) -> (i32, i32) {
    %c0_i32 = arith.constant 0 : i32
    %c0_i32_0 = arith.constant 0 : i32
    %c0_i32_1 = arith.constant 0 : i32
    return %c0_i32, %c0_i32_0 : i32, i32
  }
  func.func @transform_3(%arg0: i32) -> (i32, i32) {
    %c0_i32 = arith.constant 0 : i32
    %c0_i32_0 = arith.constant 0 : i32
    %c0_i32_1 = arith.constant 0 : i32
    return %c0_i32, %c0_i32_0 : i32, i32
  }
  func.func @transform_4(%arg0: i32) -> (i32, i32) {
    %c0_i32 = arith.constant 0 : i32
    %c0_i32_0 = arith.constant 0 : i32
    %c0_i32_1 = arith.constant 0 : i32
    return %c0_i32, %c0_i32_0 : i32, i32
  }
  func.func @transform_5(%arg0: i32) -> (i32, i32) {
    %c0_i32 = arith.constant 0 : i32
    %c0_i32_0 = arith.constant 0 : i32
    %c0_i32_1 = arith.constant 0 : i32
    return %c0_i32, %c0_i32_0 : i32, i32
  }
  func.func @transform_6(%arg0: i32) -> (i32, i32) {
    %c0_i32 = arith.constant 0 : i32
    %c0_i32_0 = arith.constant 0 : i32
    return %arg0, %c0_i32 : i32, i32
  }
}

</mosaic_0001>

<llo_original>
// kernel: tpu_custom_call.1
$region0: #{tpu_custom_call.1}
  #allocation0 [shape = 'u32[]', space=smem, size = 0x4, offset = 0x4, fixed_abs, tag = 'smem constant byte address 0x4 - core index']
  #allocation1 [shape = 'u32[144,128]{1,0:T(1,128)}', space=vmem, size = 0x12000, scoped, tag = 'internal scratch']
  %s0 = inlined_call_operand.hbm [shape: f32[16,128], index: 0, kind: input, shape index: {}]
  %s1 = inlined_call_operand.hbm [shape: f32[128,256], index: 1, kind: input, shape index: {}]
  %s2 = inlined_call_operand.vmem [shape: f32[1,256], index: 2, kind: input, shape index: {}]
  %s3 = inlined_call_operand.vmem [shape: f32[2,128], index: 3, kind: input, shape index: {}]
  %s4 = inlined_call_operand.hbm [shape: f32[128,128], index: 4, kind: input, shape index: {}]
  %s5 = inlined_call_operand.vmem [shape: f32[3,128], index: 5, kind: input, shape index: {}]
  %s6 = inlined_call_operand.hbm [shape: f32[16,128], index: 6, kind: output, shape index: {}]
  %s7 = sld [smem:[#allocation0]]
  $region46: #{tpu_custom_call.1} parent=0
    _
  %s9 = ssub.s32 1, %s7
  %s10 = scalar_select 0, %s9, %s7
  $region1: #{tpu_custom_call.1} parent=0
    #allocation2 [shape = 'u8[8192]{0}', space=vmem, size = 0x2000, scoped, tag = 'input window, operand 0, single buffered']
    #allocation3 [shape = 's32[1]{0}', space=sflag, size = 0x4, scoped, tag = 'scoped memory for tpu_custom_call.1']
    #allocation4 [shape = 's32[1]{0}', space=sflag, size = 0x4, scoped, tag = 'scoped memory for tpu_custom_call.1']
    #allocation5 [shape = 'u8[131072]{0}', space=vmem, size = 0x20000, scoped, tag = 'input window, operand 1, single buffered']
    #allocation6 [shape = 's32[1]{0}', space=sflag, size = 0x4, scoped, tag = 'scoped memory for tpu_custom_call.1']
    #allocation7 [shape = 'u8[65536]{0}', space=vmem, size = 0x10000, scoped, tag = 'input window, operand 4, single buffered']
    #allocation8 [shape = 'u8[8192]{0}', space=vmem, size = 0x2000, scoped, tag = 'output window, operand 0, single buffered']
    %11 = vsyncpa [#allocation3], 0
    %12 = vsyncpa [#allocation6], 0
    %13 = vsyncpa [#allocation4], 0
    // Predicated region
    $region2: #{tpu_custom_call.1} parent=1 // pred_check
      _
    $region3: #{tpu_custom_call.1} parent=1 // pred_check_branch
      %15 = sbr.rel (0) target = $region5
    $region4: #{tpu_custom_call.1} parent=1 // pred_region
      %s17 = ssub.s32 256, 256
      %18 = vsyncadd [#allocation3], %s17
      %s19 = sshll.u32 [#allocation2], 4
      %s20 = int_to_ptr.vmem [resolvable:$true] %s19
      %25 = dma.hbm_to_vmem [thread:$0]  %s0, 256, %s20, [#allocation3], 128, 128, 8
    $region5: #{tpu_custom_call.1} parent=1 // pred_fallthru
      _
    // Predicated region
    $region6: #{tpu_custom_call.1} parent=1 // pred_check
      _
    $region7: #{tpu_custom_call.1} parent=1 // pred_check_branch
      %27 = sbr.rel (0) target = $region9
    $region8: #{tpu_custom_call.1} parent=1 // pred_region
      %s29 = ssub.s32 4096, 4096
      %30 = vsyncadd [#allocation6], %s29
      %s31 = sshll.u32 [#allocation5], 4
      %s32 = int_to_ptr.vmem [resolvable:$true] %s31
      %37 = dma.hbm_to_vmem [thread:$0]  %s1, 4096, %s32, [#allocation6], 256, 256, 16
    $region9: #{tpu_custom_call.1} parent=1 // pred_fallthru
      _
    // Predicated region
    $region10: #{tpu_custom_call.1} parent=1 // pred_check
      _
    $region11: #{tpu_custom_call.1} parent=1 // pred_check_branch
      %39 = sbr.rel (0) target = $region13
    $region12: #{tpu_custom_call.1} parent=1 // pred_region
      _
    $region13: #{tpu_custom_call.1} parent=1 // pred_fallthru
      _
    // Predicated region
    $region14: #{tpu_custom_call.1} parent=1 // pred_check
      _
    $region15: #{tpu_custom_call.1} parent=1 // pred_check_branch
      %41 = sbr.rel (0) target = $region17
    $region16: #{tpu_custom_call.1} parent=1 // pred_region
      _
    $region17: #{tpu_custom_call.1} parent=1 // pred_fallthru
      _
    // Predicated region
    $region18: #{tpu_custom_call.1} parent=1 // pred_check
      _
    $region19: #{tpu_custom_call.1} parent=1 // pred_check_branch
      %43 = sbr.rel (0) target = $region21
    $region20: #{tpu_custom_call.1} parent=1 // pred_region
      %s45 = ssub.s32 2048, 2048
      %46 = vsyncadd [#allocation6], %s45
      %s47 = sshll.u32 [#allocation7], 4
      %s48 = int_to_ptr.vmem [resolvable:$true] %s47
      %53 = dma.hbm_to_vmem [thread:$0]  %s4, 2048, %s48, [#allocation6], 128, 128, 8
    $region21: #{tpu_custom_call.1} parent=1 // pred_fallthru
      _
    // Predicated region
    $region22: #{tpu_custom_call.1} parent=1 // pred_check
      _
    $region23: #{tpu_custom_call.1} parent=1 // pred_check_branch
      %55 = sbr.rel (0) target = $region25
    $region24: #{tpu_custom_call.1} parent=1 // pred_region
      _
    $region25: #{tpu_custom_call.1} parent=1 // pred_fallthru
      _
    // Predicated region
    $region26: #{tpu_custom_call.1} parent=1 // pred_check
      _
    $region27: #{tpu_custom_call.1} parent=1 // pred_check_branch
      %57 = sbr.rel (0) target = $region29
    $region28: #{tpu_custom_call.1} parent=1 // pred_region
      %58 = dma.done [#allocation3], 256
    $region29: #{tpu_custom_call.1} parent=1 // pred_fallthru
      _
    // Predicated region
    $region30: #{tpu_custom_call.1} parent=1 // pred_check
      _
    $region31: #{tpu_custom_call.1} parent=1 // pred_check_branch
      %60 = sbr.rel (0) target = $region33
    $region32: #{tpu_custom_call.1} parent=1 // pred_region
      %61 = dma.done [#allocation6], 4096
    $region33: #{tpu_custom_call.1} parent=1 // pred_fallthru
      _
    // Predicated region
    $region34: #{tpu_custom_call.1} parent=1 // pred_check
      _
    $region35: #{tpu_custom_call.1} parent=1 // pred_check_branch
      %63 = sbr.rel (0) target = $region37
    $region36: #{tpu_custom_call.1} parent=1 // pred_region
      %64 = dma.done [#allocation6], 2048
    $region37: #{tpu_custom_call.1} parent=1 // pred_fallthru
      _
    %v65 = vld [vmem:[#allocation2] sm:$0xff]
    %v66 = vld [vmem:[#allocation2 + $0x8] sm:$0xff]
    %v67 = vld [vmem:[#allocation5] sm:$0xff]
    %v68 = vld [vmem:[#allocation5 + $0x8] sm:$0xff]
    %v69 = vld [vmem:[#allocation5 + $0x10] sm:$0xff]
    %v70 = vld [vmem:[#allocation5 + $0x18] sm:$0xff]
    %v71 = vld [vmem:[#allocation5 + $0x20] sm:$0xff]
    %v72 = vld [vmem:[#allocation5 + $0x28] sm:$0xff]
    %v73 = vld [vmem:[#allocation5 + $0x30] sm:$0xff]
    %v74 = vld [vmem:[#allocation5 + $0x38] sm:$0xff]
    %v75 = vld [vmem:[#allocation5 + $0x40] sm:$0xff]
    %v76 = vld [vmem:[#allocation5 + $0x48] sm:$0xff]
    %v77 = vld [vmem:[#allocation5 + $0x50] sm:$0xff]
    %v78 = vld [vmem:[#allocation5 + $0x58] sm:$0xff]
    %v79 = vld [vmem:[#allocation5 + $0x60] sm:$0xff]
    %v80 = vld [vmem:[#allocation5 + $0x68] sm:$0xff]
    %v81 = vld [vmem:[#allocation5 + $0x70] sm:$0xff]
    %v82 = vld [vmem:[#allocation5 + $0x78] sm:$0xff]
    %v83 = vld [vmem:[#allocation5 + $0x80] sm:$0xff]
    %v84 = vld [vmem:[#allocation5 + $0x88] sm:$0xff]
    %v85 = vld [vmem:[#allocation5 + $0x90] sm:$0xff]
    %v86 = vld [vmem:[#allocation5 + $0x98] sm:$0xff]
    %v87 = vld [vmem:[#allocation5 + $0xa0] sm:$0xff]
    %v88 = vld [vmem:[#allocation5 + $0xa8] sm:$0xff]
    %v89 = vld [vmem:[#allocation5 + $0xb0] sm:$0xff]
    %v90 = vld [vmem:[#allocation5 + $0xb8] sm:$0xff]
    %v91 = vld [vmem:[#allocation5 + $0xc0] sm:$0xff]
    %v92 = vld [vmem:[#allocation5 + $0xc8] sm:$0xff]
    %v93 = vld [vmem:[#allocation5 + $0xd0] sm:$0xff]
    %v94 = vld [vmem:[#allocation5 + $0xd8] sm:$0xff]
    %v95 = vld [vmem:[#allocation5 + $0xe0] sm:$0xff]
    %v96 = vld [vmem:[#allocation5 + $0xe8] sm:$0xff]
    %v97 = vld [vmem:[#allocation5 + $0xf0] sm:$0xff]
    %v98 = vld [vmem:[#allocation5 + $0xf8] sm:$0xff]
    %v99 = vld [vmem:[%s2] sm:$0x3]
    %v101 = vlaneseq
    %v102 = vshrl.u32 %v101, 7
    %v103 = vsub.s32 0, %v102
    %v104 = vrot.slane %v99, %v103
    %v105 = vlaneseq
    %v106 = vshrl.u32 %v105, 7
    %v107 = vsub.s32 1, %v106
    %v108 = vrot.slane %v99, %v107
    %111 = vmatprep.subr.mxu0 %v68
    %112 = vmatpush1.msra.mxu0 %v67
    %113 = vmatprep.subr.mxu0 %v70
    %114 = vmatpush1.msra.mxu0 %v69
    %115 = vmatprep.subr.mxu0 %v72
    %116 = vmatpush1.msra.mxu0 %v71
    %117 = vmatprep.subr.mxu0 %v74
    %118 = vmatpush1.msra.mxu0 %v73
    %119 = vmatprep.subr.mxu0 %v76
    %120 = vmatpush1.msra.mxu0 %v75
    %121 = vmatprep.subr.mxu0 %v78
    %122 = vmatpush1.msra.mxu0 %v77
    %123 = vmatprep.subr.mxu0 %v80
    %124 = vmatpush1.msra.mxu0 %v79
    %125 = vmatprep.subr.mxu0 %v82
    %126 = vmatpush1.msra.mxu0 %v81
    %127 = vmatprep.subr.mxu0 %v84
    %128 = vmatpush1.msra.mxu0 %v83
    %129 = vmatprep.subr.mxu0 %v86
    %130 = vmatpush1.msra.mxu0 %v85
    %131 = vmatprep.subr.mxu0 %v88
    %132 = vmatpush1.msra.mxu0 %v87
    %133 = vmatprep.subr.mxu0 %v90
    %134 = vmatpush1.msra.mxu0 %v89
    %135 = vmatprep.subr.mxu0 %v92
    %136 = vmatpush1.msra.mxu0 %v91
    %137 = vmatprep.subr.mxu0 %v94
    %138 = vmatpush1.msra.mxu0 %v93
    %139 = vmatprep.subr.mxu0 %v96
    %140 = vmatpush1.msra.mxu0 %v95
    %141 = vmatprep.subr.mxu0 %v98
    %142 = vmatpush1.msra.mxu0 %v97
    %143 = vmatprep.subr.mxu0 0.0
    %144 = vmatpush1.msra.mxu0 0.0
    %145 = vmatprep.subr.mxu0 0.0
    %146 = vmatpush1.msra.mxu0 0.0
    %147 = vmatprep.subr.mxu0 0.0
    %148 = vmatpush1.msra.mxu0 0.0
    %149 = vmatprep.subr.mxu0 0.0
    %150 = vmatpush1.msra.mxu0 0.0
    %151 = vmatprep.subr.mxu0 0.0
    %152 = vmatpush1.msra.mxu0 0.0
    %153 = vmatprep.subr.mxu0 0.0
    %154 = vmatpush1.msra.mxu0 0.0
    %155 = vmatprep.subr.mxu0 0.0
    %156 = vmatpush1.msra.mxu0 0.0
    %157 = vmatprep.subr.mxu0 0.0
    %158 = vmatpush1.msra.mxu0 0.0
    %159 = vmatprep.subr.mxu0 0.0
    %160 = vmatpush1.msra.mxu0 0.0
    %161 = vmatprep.subr.mxu0 0.0
    %162 = vmatpush1.msra.mxu0 0.0
    %163 = vmatprep.subr.mxu0 0.0
    %164 = vmatpush1.msra.mxu0 0.0
    %165 = vmatprep.subr.mxu0 0.0
    %166 = vmatpush1.msra.mxu0 0.0
    %167 = vmatprep.subr.mxu0 0.0
    %168 = vmatpush1.msra.mxu0 0.0
    %169 = vmatprep.subr.mxu0 0.0
    %170 = vmatpush1.msra.mxu0 0.0
    %171 = vmatprep.subr.mxu0 0.0
    %172 = vmatpush1.msra.mxu0 0.0
    %173 = vmatprep.subr.mxu0 0.0
    %174 = vmatpush1.msra.mxu0 0.0
    %175 = vmatprep.mubr.f32.mxu0 0.0
    %176 = vmatmul.mubr.f32.gmra.mrb[0].mxu0 %v65
    %v177 = vpop.f32.mrb[0].mxu0
    %v178 = vadd.f32 %v104, %v177
    %v179 = vpop.f32.mrb[0].mxu0
    %v180 = vadd.f32 %v108, %v179
    %181 = vmatprep.mubr.f32.mxu0 0.0
    %182 = vmatmul.mubr.f32.gmra.mrb[0].mxu0 %v66
    %v183 = vpop.f32.mrb[0].mxu0
    %v184 = vadd.f32 %v104, %v183
    %v185 = vpop.f32.mrb[0].mxu0
    %v186 = vadd.f32 %v108, %v185
    %187 = vdwg.mxu0
    %v188 = vld [vmem:[%s3] sm:$0x1]
    %v189 = vld [vmem:[%s3 + $0x1] sm:$0x1]
    %190 = vadd.xlane.f32.xlu0 %v178
    %v191 = vpop.xlane.xlu0 %190
    %192 = vadd.xlane.f32.xlu0 %v184
    %v193 = vpop.xlane.xlu0 %192
    %v194 = vmul.f32 %v191, 0.03125
    %v195 = vmul.f32 %v193, 0.03125
    %v196 = vsub.f32 %v178, %v194
    %v197 = vsub.f32 %v184, %v195
    %v198 = vlaneseq
    %v199 = vand.u32 %v198, 127
    %vm200 = vcmp.lt.s32.totalorder %v199, 32
    %v201 = vsel %vm200, 1, 0
    %vm202 = vcmp.eq.s32.totalorder %v201, 1
    %v203 = vsel %vm202, %v196, 0.0
    %v204 = vsel %vm202, %v197, 0.0
    %v205 = vmul.f32 %v203, %v203
    %v206 = vmul.f32 %v204, %v204
    %207 = vadd.xlane.f32.xlu0 %v205
    %v208 = vpop.xlane.xlu0 %207
    %209 = vadd.xlane.f32.xlu0 %v206
    %v210 = vpop.xlane.xlu0 %209
    %v211 = vmul.f32 %v208, 0.03125
    %v212 = vmul.f32 %v210, 0.03125
    %v213 = vadd.f32 %v211, 1e-05
    %v214 = vadd.f32 %v212, 1e-05
    %v215 = vrsqrt.pop %v213
    %v216 = vrsqrt.pop %v214
    %v217 = vmul.f32 %v203, %v215
    %v218 = vmul.f32 %v204, %v216
    %v219 = vlaneseq
    %v220 = vshrl.u32 %v219, 7
    %v221 = vsub.s32 0, %v220
    %v222 = vrot.slane %v188, %v221
    %v223 = vmul.f32 %v217, %v222
    %v224 = vmul.f32 %v218, %v222
    %v225 = vlaneseq
    %v226 = vshrl.u32 %v225, 7
    %v227 = vsub.s32 0, %v226
    %v228 = vrot.slane %v189, %v227
    %v229 = vadd.f32 %v223, %v228
    %v230 = vadd.f32 %v224, %v228
    %v231 = vmax.f32 %v229, 0.0
    %v232 = vmax.f32 %v230, 0.0
    %v233 = vld [vmem:[#allocation7] sm:$0xff]
    %v234 = vld [vmem:[#allocation7 + $0x8] sm:$0xff]
    %v235 = vld [vmem:[#allocation7 + $0x10] sm:$0xff]
    %v236 = vld [vmem:[#allocation7 + $0x18] sm:$0xff]
    %v237 = vld [vmem:[#allocation7 + $0x20] sm:$0xff]
    %v238 = vld [vmem:[#allocation7 + $0x28] sm:$0xff]
    %v239 = vld [vmem:[#allocation7 + $0x30] sm:$0xff]
    %v240 = vld [vmem:[#allocation7 + $0x38] sm:$0xff]
    %v241 = vld [vmem:[#allocation7 + $0x40] sm:$0xff]
    %v242 = vld [vmem:[#allocation7 + $0x48] sm:$0xff]
    %v243 = vld [vmem:[#allocation7 + $0x50] sm:$0xff]
    %v244 = vld [vmem:[#allocation7 + $0x58] sm:$0xff]
    %v245 = vld [vmem:[#allocation7 + $0x60] sm:$0xff]
    %v246 = vld [vmem:[#allocation7 + $0x68] sm:$0xff]
    %v247 = vld [vmem:[#allocation7 + $0x70] sm:$0xff]
    %v248 = vld [vmem:[#allocation7 + $0x78] sm:$0xff]
    %v249 = vld [vmem:[%s5] sm:$0x1]
    %v250 = vlaneseq
    %v251 = vshrl.u32 %v250, 7
    %v252 = vsub.s32 0, %v251
    %v253 = vrot.slane %v249, %v252
    %254 = vmatprep.subr.mxu0 0.0
    %255 = vmatpush1.msra.mxu0 %v233
    %256 = vmatprep.subr.mxu0 0.0
    %257 = vmatpush1.msra.mxu0 %v234
    %258 = vmatprep.subr.mxu0 0.0
    %259 = vmatpush1.msra.mxu0 %v235
    %260 = vmatprep.subr.mxu0 0.0
    %261 = vmatpush1.msra.mxu0 %v236
    %262 = vmatprep.subr.mxu0 0.0
    %263 = vmatpush1.msra.mxu0 %v237
    %264 = vmatprep.subr.mxu0 0.0
    %265 = vmatpush1.msra.mxu0 %v238
    %266 = vmatprep.subr.mxu0 0.0
    %267 = vmatpush1.msra.mxu0 %v239
    %268 = vmatprep.subr.mxu0 0.0
    %269 = vmatpush1.msra.mxu0 %v240
    %270 = vmatprep.subr.mxu0 0.0
    %271 = vmatpush1.msra.mxu0 %v241
    %272 = vmatprep.subr.mxu0 0.0
    %273 = vmatpush1.msra.mxu0 %v242
    %274 = vmatprep.subr.mxu0 0.0
    %275 = vmatpush1.msra.mxu0 %v243
    %276 = vmatprep.subr.mxu0 0.0
    %277 = vmatpush1.msra.mxu0 %v244
    %278 = vmatprep.subr.mxu0 0.0
    %279 = vmatpush1.msra.mxu0 %v245
    %280 = vmatprep.subr.mxu0 0.0
    %281 = vmatpush1.msra.mxu0 %v246
    %282 = vmatprep.subr.mxu0 0.0
    %283 = vmatpush1.msra.mxu0 %v247
    %284 = vmatprep.subr.mxu0 0.0
    %285 = vmatpush1.msra.mxu0 %v248
    %286 = vmatprep.subr.mxu0 0.0
    %287 = vmatpush1.msra.mxu0 0.0
    %288 = vmatprep.subr.mxu0 0.0
    %289 = vmatpush1.msra.mxu0 0.0
    %290 = vmatprep.subr.mxu0 0.0
    %291 = vmatpush1.msra.mxu0 0.0
    %292 = vmatprep.subr.mxu0 0.0
    %293 = vmatpush1.msra.mxu0 0.0
    %294 = vmatprep.subr.mxu0 0.0
    %295 = vmatpush1.msra.mxu0 0.0
    %296 = vmatprep.subr.mxu0 0.0
    %297 = vmatpush1.msra.mxu0 0.0
    %298 = vmatprep.subr.mxu0 0.0
    %299 = vmatpush1.msra.mxu0 0.0
    %300 = vmatprep.subr.mxu0 0.0
    %301 = vmatpush1.msra.mxu0 0.0
    %302 = vmatprep.subr.mxu0 0.0
    %303 = vmatpush1.msra.mxu0 0.0
    %304 = vmatprep.subr.mxu0 0.0
    %305 = vmatpush1.msra.mxu0 0.0
    %306 = vmatprep.subr.mxu0 0.0
    %307 = vmatpush1.msra.mxu0 0.0
    %308 = vmatprep.subr.mxu0 0.0
    %309 = vmatpush1.msra.mxu0 0.0
    %310 = vmatprep.subr.mxu0 0.0
    %311 = vmatpush1.msra.mxu0 0.0
    %312 = vmatprep.subr.mxu0 0.0
    %313 = vmatpush1.msra.mxu0 0.0
    %314 = vmatprep.subr.mxu0 0.0
    %315 = vmatpush1.msra.mxu0 0.0
    %316 = vmatprep.subr.mxu0 0.0
    %317 = vmatpush1.msra.mxu0 0.0
    %318 = vmatprep.mubr.f32.mxu0 0.0
    %319 = vmatmul.mubr.f32.gmra.mrb[0].mxu0 %v231
    %v320 = vpop.f32.mrb[0].mxu0
    %v321 = vadd.f32 %v253, %v320
    %v322 = vpop.f32.mrb[0].mxu0
    %323 = vmatprep.mubr.f32.mxu0 0.0
    %324 = vmatmul.mubr.f32.gmra.mrb[0].mxu0 %v232
    %v325 = vpop.f32.mrb[0].mxu0
    %v326 = vadd.f32 %v253, %v325
    %v327 = vpop.f32.mrb[0].mxu0
    %328 = vdwg.mxu0
    %v329 = vld [vmem:[%s5 + $0x1] sm:$0x1]
    %v330 = vld [vmem:[%s5 + $0x2] sm:$0x1]
    %331 = vadd.xlane.f32.xlu0 %v321
    %v332 = vpop.xlane.xlu0 %331
    %333 = vadd.xlane.f32.xlu0 %v326
    %v334 = vpop.xlane.xlu0 %333
    %v335 = vmul.f32 %v332, 0.041666668
    %v336 = vmul.f32 %v334, 0.041666668
    %v337 = vsub.f32 %v321, %v335
    %v338 = vsub.f32 %v326, %v336
    %vm339 = vcmp.lt.s32.totalorder %v199, 24
    %v340 = vsel %vm339, 1, 0
    %vm341 = vcmp.eq.s32.totalorder %v340, 1
    %v342 = vsel %vm341, %v337, 0.0
    %v343 = vsel %vm341, %v338, 0.0
    %v344 = vmul.f32 %v342, %v342
    %v345 = vmul.f32 %v343, %v343
    %346 = vadd.xlane.f32.xlu0 %v344
    %v347 = vpop.xlane.xlu0 %346
    %348 = vadd.xlane.f32.xlu0 %v345
    %v349 = vpop.xlane.xlu0 %348
    %v350 = vmul.f32 %v347, 0.041666668
    %v351 = vmul.f32 %v349, 0.041666668
    %v352 = vadd.f32 %v350, 1e-05
    %v353 = vadd.f32 %v351, 1e-05
    %v354 = vrsqrt.pop %v352
    %v355 = vrsqrt.pop %v353
    %v356 = vmul.f32 %v342, %v354
    %v357 = vmul.f32 %v343, %v355
    %v358 = vlaneseq
    %v359 = vshrl.u32 %v358, 7
    %v360 = vsub.s32 0, %v359
    %v361 = vrot.slane %v329, %v360
    %v362 = vmul.f32 %v356, %v361
    %v363 = vmul.f32 %v357, %v361
    %v364 = vlaneseq
    %v365 = vshrl.u32 %v364, 7
    %v366 = vsub.s32 0, %v365
    %v367 = vrot.slane %v330, %v366
    %v368 = vadd.f32 %v362, %v367
    %v369 = vadd.f32 %v363, %v367
    %v370 = vadd.f32 %v368, %v180
    %v371 = vadd.f32 %v369, %v186
    %v372 = vmax.f32 %v370, 0.0
    %v373 = vmax.f32 %v371, 0.0
    %374 = vst [vmem:[#allocation8] sm:$0xff] %v372
    %375 = vst [vmem:[#allocation8 + $0x8] sm:$0xff] %v373
    // Predicated region
    $region38: #{tpu_custom_call.1} parent=1 // pred_check
      _
    $region39: #{tpu_custom_call.1} parent=1 // pred_check_branch
      %377 = sbr.rel (0) target = $region41
    $region40: #{tpu_custom_call.1} parent=1 // pred_region
      %s379 = ssub.s32 256, 256
      %380 = vsyncadd [#allocation4], %s379
      %s381 = sshll.u32 [#allocation8], 4
      %s382 = int_to_ptr.vmem [resolvable:$true] %s381
      %387 = dma.vmem_to_hbm [thread:$0]  %s382, 256, %s6, [#allocation4], 128, 128, 8
    $region41: #{tpu_custom_call.1} parent=1 // pred_fallthru
      _
    // Predicated region
    $region42: #{tpu_custom_call.1} parent=1 // pred_check
      _
    $region43: #{tpu_custom_call.1} parent=1 // pred_check_branch
      %389 = sbr.rel (0) target = $region45
    $region44: #{tpu_custom_call.1} parent=1 // pred_region
      %390 = dma.done [#allocation4], 256
    $region45: #{tpu_custom_call.1} parent=1 // pred_fallthru
      _
    %391 = vsyncpa [#allocation3], 1
    %392 = vsyncpa [#allocation6], 1
    %393 = vsyncpa [#allocation4], 1

// kernel: tpu_custom_call.1
$region0: #{tpu_custom_call.1}
  #allocation0 [shape = 'u32[]', space=smem, size = 0x4, offset = 0x4, fixed_abs, tag = 'smem constant byte address 0x4 - core index']
  #allocation1 [shape = 'u32[144,128]{1,0:T(1,128)}', space=vmem, size = 0x12000, scoped, tag = 'internal scratch']
  %s0 = inlined_call_operand.hbm [shape: f32[16,128], index: 0, kind: input, shape index: {}]
  %s1 = inlined_call_operand.hbm [shape: f32[128,256], index: 1, kind: input, shape index: {}]
  %s2 = inlined_call_operand.vmem [shape: f32[1,256], index: 2, kind: input, shape index: {}]
  %s3 = inlined_call_operand.vmem [shape: f32[2,128], index: 3, kind: input, shape index: {}]
  %s4 = inlined_call_operand.hbm [shape: f32[128,128], index: 4, kind: input, shape index: {}]
  %s5 = inlined_call_operand.vmem [shape: f32[3,128], index: 5, kind: input, shape index: {}]
  %s6 = inlined_call_operand.hbm [shape: f32[16,128], index: 6, kind: output, shape index: {}]
  %s7 = sld [smem:[#allocation0]]
  $region46: #{tpu_custom_call.1} parent=0
    _
  %s9 = ssub.s32 1, %s7
  %s10 = scalar_select 0, %s9, %s7
  $region1: #{tpu_custom_call.1} parent=0
    #allocation2 [shape = 'u8[8192]{0}', space=vmem, size = 0x2000, scoped, tag = 'input window, operand 0, single buffered']
    #allocation3 [shape = 's32[1]{0}', space=sflag, size = 0x4, scoped, tag = 'scoped memory for tpu_custom_call.1']
    #allocation4 [shape = 's32[1]{0}', space=sflag, size = 0x4, scoped, tag = 'scoped memory for tpu_custom_call.1']
    #allocation5 [shape = 'u8[131072]{0}', space=vmem, size = 0x20000, scoped, tag = 'input window, operand 1, single buffered']
    #allocation6 [shape = 's32[1]{0}', space=sflag, size = 0x4, scoped, tag = 'scoped memory for tpu_custom_call.1']
    #allocation7 [shape = 'u8[65536]{0}', space=vmem, size = 0x10000, scoped, tag = 'input window, operand 4, single buffered']
    #allocation8 [shape = 'u8[8192]{0}', space=vmem, size = 0x2000, scoped, tag = 'output window, operand 0, single buffered']
    %11 = vsyncpa [#allocation3], 0
    %12 = vsyncpa [#allocation6], 0
    %13 = vsyncpa [#allocation4], 0
    // Predicated region
    $region2: #{tpu_custom_call.1} parent=1 // pred_check
      _
    $region3: #{tpu_custom_call.1} parent=1 // pred_check_branch
      %15 = sbr.rel (0) target = $region5
    $region4: #{tpu_custom_call.1} parent=1 // pred_region
      %s17 = ssub.s32 256, 256
      %18 = vsyncadd [#allocation3], %s17
      %s19 = sshll.u32 [#allocation2], 4
      %s20 = int_to_ptr.vmem [resolvable:$true] %s19
      %25 = dma.hbm_to_vmem [thread:$0]  %s0, 256, %s20, [#allocation3], 128, 128, 8
    $region5: #{tpu_custom_call.1} parent=1 // pred_fallthru
      _
    // Predicated region
    $region6: #{tpu_custom_call.1} parent=1 // pred_check
      _
    $region7: #{tpu_custom_call.1} parent=1 // pred_check_branch
      %27 = sbr.rel (0) target = $region9
    $region8: #{tpu_custom_call.1} parent=1 // pred_region
      %s29 = ssub.s32 4096, 4096
      %30 = vsyncadd [#allocation6], %s29
      %s31 = sshll.u32 [#allocation5], 4
      %s32 = int_to_ptr.vmem [resolvable:$true] %s31
      %37 = dma.hbm_to_vmem [thread:$0]  %s1, 4096, %s32, [#allocation6], 256, 256, 16
    $region9: #{tpu_custom_call.1} parent=1 // pred_fallthru
      _
    // Predicated region
    $region10: #{tpu_custom_call.1} parent=1 // pred_check
      _
    $region11: #{tpu_custom_call.1} parent=1 // pred_check_branch
      %39 = sbr.rel (0) target = $region13
    $region12: #{tpu_custom_call.1} parent=1 // pred_region
      _
    $region13: #{tpu_custom_call.1} parent=1 // pred_fallthru
      _
    // Predicated region
    $region14: #{tpu_custom_call.1} parent=1 // pred_check
      _
    $region15: #{tpu_custom_call.1} parent=1 // pred_check_branch
      %41 = sbr.rel (0) target = $region17
    $region16: #{tpu_custom_call.1} parent=1 // pred_region
      _
    $region17: #{tpu_custom_call.1} parent=1 // pred_fallthru
      _
    // Predicated region
    $region18: #{tpu_custom_call.1} parent=1 // pred_check
      _
    $region19: #{tpu_custom_call.1} parent=1 // pred_check_branch
      %43 = sbr.rel (0) target = $region21
    $region20: #{tpu_custom_call.1} parent=1 // pred_region
      %s45 = ssub.s32 2048, 2048
      %46 = vsyncadd [#allocation6], %s45
      %s47 = sshll.u32 [#allocation7], 4
      %s48 = int_to_ptr.vmem [resolvable:$true] %s47
      %53 = dma.hbm_to_vmem [thread:$0]  %s4, 2048, %s48, [#allocation6], 128, 128, 8
    $region21: #{tpu_custom_call.1} parent=1 // pred_fallthru
      _
    // Predicated region
    $region22: #{tpu_custom_call.1} parent=1 // pred_check
      _
    $region23: #{tpu_custom_call.1} parent=1 // pred_check_branch
      %55 = sbr.rel (0) target = $region25
    $region24: #{tpu_custom_call.1} parent=1 // pred_region
      _
    $region25: #{tpu_custom_call.1} parent=1 // pred_fallthru
      _
    // Predicated region
    $region26: #{tpu_custom_call.1} parent=1 // pred_check
      _
    $region27: #{tpu_custom_call.1} parent=1 // pred_check_branch
      %57 = sbr.rel (0) target = $region29
    $region28: #{tpu_custom_call.1} parent=1 // pred_region
      %58 = dma.done [#allocation3], 256
    $region29: #{tpu_custom_call.1} parent=1 // pred_fallthru
      _
    // Predicated region
    $region30: #{tpu_custom_call.1} parent=1 // pred_check
      _
    $region31: #{tpu_custom_call.1} parent=1 // pred_check_branch
      %60 = sbr.rel (0) target = $region33
    $region32: #{tpu_custom_call.1} parent=1 // pred_region
      %61 = dma.done [#allocation6], 4096
    $region33: #{tpu_custom_call.1} parent=1 // pred_fallthru
      _
    // Predicated region
    $region34: #{tpu_custom_call.1} parent=1 // pred_check
      _
    $region35: #{tpu_custom_call.1} parent=1 // pred_check_branch
      %63 = sbr.rel (0) target = $region37
    $region36: #{tpu_custom_call.1} parent=1 // pred_region
      %64 = dma.done [#allocation6], 2048
    $region37: #{tpu_custom_call.1} parent=1 // pred_fallthru
      _
    %v65 = vld [vmem:[#allocation2] sm:$0xff]
    %v66 = vld [vmem:[#allocation2 + $0x8] sm:$0xff]
    %v67 = vld [vmem:[#allocation5] sm:$0xff]
    %v68 = vld [vmem:[#allocation5 + $0x8] sm:$0xff]
    %v69 = vld [vmem:[#allocation5 + $0x10] sm:$0xff]
    %v70 = vld [vmem:[#allocation5 + $0x18] sm:$0xff]
    %v71 = vld [vmem:[#allocation5 + $0x20] sm:$0xff]
    %v72 = vld [vmem:[#allocation5 + $0x28] sm:$0xff]
    %v73 = vld [vmem:[#allocation5 + $0x30] sm:$0xff]
    %v74 = vld [vmem:[#allocation5 + $0x38] sm:$0xff]
    %v75 = vld [vmem:[#allocation5 + $0x40] sm:$0xff]
    %v76 = vld [vmem:[#allocation5 + $0x48] sm:$0xff]
    %v77 = vld [vmem:[#allocation5 + $0x50] sm:$0xff]
    %v78 = vld [vmem:[#allocation5 + $0x58] sm:$0xff]
    %v79 = vld [vmem:[#allocation5 + $0x60] sm:$0xff]
    %v80 = vld [vmem:[#allocation5 + $0x68] sm:$0xff]
    %v81 = vld [vmem:[#allocation5 + $0x70] sm:$0xff]
    %v82 = vld [vmem:[#allocation5 + $0x78] sm:$0xff]
    %v83 = vld [vmem:[#allocation5 + $0x80] sm:$0xff]
    %v84 = vld [vmem:[#allocation5 + $0x88] sm:$0xff]
    %v85 = vld [vmem:[#allocation5 + $0x90] sm:$0xff]
    %v86 = vld [vmem:[#allocation5 + $0x98] sm:$0xff]
    %v87 = vld [vmem:[#allocation5 + $0xa0] sm:$0xff]
    %v88 = vld [vmem:[#allocation5 + $0xa8] sm:$0xff]
    %v89 = vld [vmem:[#allocation5 + $0xb0] sm:$0xff]
    %v90 = vld [vmem:[#allocation5 + $0xb8] sm:$0xff]
    %v91 = vld [vmem:[#allocation5 + $0xc0] sm:$0xff]
    %v92 = vld [vmem:[#allocation5 + $0xc8] sm:$0xff]
    %v93 = vld [vmem:[#allocation5 + $0xd0] sm:$0xff]
    %v94 = vld [vmem:[#allocation5 + $0xd8] sm:$0xff]
    %v95 = vld [vmem:[#allocation5 + $0xe0] sm:$0xff]
    %v96 = vld [vmem:[#allocation5 + $0xe8] sm:$0xff]
    %v97 = vld [vmem:[#allocation5 + $0xf0] sm:$0xff]
    %v98 = vld [vmem:[#allocation5 + $0xf8] sm:$0xff]
    %v99 = vld [vmem:[%s2] sm:$0x3]
    %v101 = vlaneseq
    %v102 = vshrl.u32 %v101, 7
    %v103 = vsub.s32 0, %v102
    %v104 = vrot.slane %v99, %v103
    %v105 = vlaneseq
    %v106 = vshrl.u32 %v105, 7
    %v107 = vsub.s32 1, %v106
    %v108 = vrot.slane %v99, %v107
    %111 = vmatprep.subr.mxu0 %v68
    %112 = vmatpush1.msra.mxu0 %v67
    %113 = vmatprep.subr.mxu0 %v70
    %114 = vmatpush1.msra.mxu0 %v69
    %115 = vmatprep.subr.mxu0 %v72
    %116 = vmatpush1.msra.mxu0 %v71
    %117 = vmatprep.subr.mxu0 %v74
    %118 = vmatpush1.msra.mxu0 %v73
    %119 = vmatprep.subr.mxu0 %v76
    %120 = vmatpush1.msra.mxu0 %v75
    %121 = vmatprep.subr.mxu0 %v78
    %122 = vmatpush1.msra.mxu0 %v77
    %123 = vmatprep.subr.mxu0 %v80
    %124 = vmatpush1.msra.mxu0 %v79
    %125 = vmatprep.subr.mxu0 %v82
    %126 = vmatpush1.msra.mxu0 %v81
    %127 = vmatprep.subr.mxu0 %v84
    %128 = vmatpush1.msra.mxu0 %v83
    %129 = vmatprep.subr.mxu0 %v86
    %130 = vmatpush1.msra.mxu0 %v85
    %131 = vmatprep.subr.mxu0 %v88
    %132 = vmatpush1.msra.mxu0 %v87
    %133 = vmatprep.subr.mxu0 %v90
    %134 = vmatpush1.msra.mxu0 %v89
    %135 = vmatprep.subr.mxu0 %v92
    %136 = vmatpush1.msra.mxu0 %v91
    %137 = vmatprep.subr.mxu0 %v94
    %138 = vmatpush1.msra.mxu0 %v93
    %139 = vmatprep.subr.mxu0 %v96
    %140 = vmatpush1.msra.mxu0 %v95
    %141 = vmatprep.subr.mxu0 %v98
    %142 = vmatpush1.msra.mxu0 %v97
    %143 = vmatprep.subr.mxu0 0.0
    %144 = vmatpush1.msra.mxu0 0.0
    %145 = vmatprep.subr.mxu0 0.0
    %146 = vmatpush1.msra.mxu0 0.0
    %147 = vmatprep.subr.mxu0 0.0
    %148 = vmatpush1.msra.mxu0 0.0
    %149 = vmatprep.subr.mxu0 0.0
    %150 = vmatpush1.msra.mxu0 0.0
    %151 = vmatprep.subr.mxu0 0.0
    %152 = vmatpush1.msra.mxu0 0.0
    %153 = vmatprep.subr.mxu0 0.0
    %154 = vmatpush1.msra.mxu0 0.0
    %155 = vmatprep.subr.mxu0 0.0
    %156 = vmatpush1.msra.mxu0 0.0
    %157 = vmatprep.subr.mxu0 0.0
    %158 = vmatpush1.msra.mxu0 0.0
    %159 = vmatprep.subr.mxu0 0.0
    %160 = vmatpush1.msra.mxu0 0.0
    %161 = vmatprep.subr.mxu0 0.0
    %162 = vmatpush1.msra.mxu0 0.0
    %163 = vmatprep.subr.mxu0 0.0
    %164 = vmatpush1.msra.mxu0 0.0
    %165 = vmatprep.subr.mxu0 0.0
    %166 = vmatpush1.msra.mxu0 0.0
    %167 = vmatprep.subr.mxu0 0.0
    %168 = vmatpush1.msra.mxu0 0.0
    %169 = vmatprep.subr.mxu0 0.0
    %170 = vmatpush1.msra.mxu0 0.0
    %171 = vmatprep.subr.mxu0 0.0
    %172 = vmatpush1.msra.mxu0 0.0
    %173 = vmatprep.subr.mxu0 0.0
    %174 = vmatpush1.msra.mxu0 0.0
    %175 = vmatprep.mubr.f32.mxu0 0.0
    %176 = vmatmul.mubr.f32.gmra.mrb[0].mxu0 %v65
    %v177 = vpop.f32.mrb[0].mxu0
    %v178 = vadd.f32 %v104, %v177
    %v179 = vpop.f32.mrb[0].mxu0
    %v180 = vadd.f32 %v108, %v179
    %181 = vmatprep.mubr.f32.mxu0 0.0
    %182 = vmatmul.mubr.f32.gmra.mrb[0].mxu0 %v66
    %v183 = vpop.f32.mrb[0].mxu0
    %v184 = vadd.f32 %v104, %v183
    %v185 = vpop.f32.mrb[0].mxu0
    %v186 = vadd.f32 %v108, %v185
    %187 = vdwg.mxu0
    %v188 = vld [vmem:[%s3] sm:$0x1]
    %v189 = vld [vmem:[%s3 + $0x1] sm:$0x1]
    %190 = vadd.xlane.f32.xlu0 %v178
    %v191 = vpop.xlane.xlu0 %190
    %192 = vadd.xlane.f32.xlu0 %v184
    %v193 = vpop.xlane.xlu0 %192
    %v194 = vmul.f32 %v191, 0.03125
    %v195 = vmul.f32 %v193, 0.03125
    %v196 = vsub.f32 %v178, %v194
    %v197 = vsub.f32 %v184, %v195
    %v198 = vlaneseq
    %v199 = vand.u32 %v198, 127
    %vm200 = vcmp.lt.s32.totalorder %v199, 32
    %v201 = vsel %vm200, 1, 0
    %vm202 = vcmp.eq.s32.totalorder %v201, 1
    %v203 = vsel %vm202, %v196, 0.0
    %v204 = vsel %vm202, %v197, 0.0
    %v205 = vmul.f32 %v203, %v203
    %v206 = vmul.f32 %v204, %v204
    %207 = vadd.xlane.f32.xlu0 %v205
    %v208 = vpop.xlane.xlu0 %207
    %209 = vadd.xlane.f32.xlu0 %v206
    %v210 = vpop.xlane.xlu0 %209
    %v211 = vmul.f32 %v208, 0.03125
    %v212 = vmul.f32 %v210, 0.03125
    %v213 = vadd.f32 %v211, 1e-05
    %v214 = vadd.f32 %v212, 1e-05
    %v215 = vrsqrt.pop %v213
    %v216 = vrsqrt.pop %v214
    %v217 = vmul.f32 %v203, %v215
    %v218 = vmul.f32 %v204, %v216
    %v219 = vlaneseq
    %v220 = vshrl.u32 %v219, 7
    %v221 = vsub.s32 0, %v220
    %v222 = vrot.slane %v188, %v221
    %v223 = vmul.f32 %v217, %v222
    %v224 = vmul.f32 %v218, %v222
    %v225 = vlaneseq
    %v226 = vshrl.u32 %v225, 7
    %v227 = vsub.s32 0, %v226
    %v228 = vrot.slane %v189, %v227
    %v229 = vadd.f32 %v223, %v228
    %v230 = vadd.f32 %v224, %v228
    %v231 = vmax.f32 %v229, 0.0
    %v232 = vmax.f32 %v230, 0.0
    %v233 = vld [vmem:[#allocation7] sm:$0xff]
    %v234 = vld [vmem:[#allocation7 + $0x8] sm:$0xff]
    %v235 = vld [vmem:[#allocation7 + $0x10] sm:$0xff]
    %v236 = vld [vmem:[#allocation7 + $0x18] sm:$0xff]
    %v237 = vld [vmem:[#allocation7 + $0x20] sm:$0xff]
    %v238 = vld [vmem:[#allocation7 + $0x28] sm:$0xff]
    %v239 = vld [vmem:[#allocation7 + $0x30] sm:$0xff]
    %v240 = vld [vmem:[#allocation7 + $0x38] sm:$0xff]
    %v241 = vld [vmem:[#allocation7 + $0x40] sm:$0xff]
    %v242 = vld [vmem:[#allocation7 + $0x48] sm:$0xff]
    %v243 = vld [vmem:[#allocation7 + $0x50] sm:$0xff]
    %v244 = vld [vmem:[#allocation7 + $0x58] sm:$0xff]
    %v245 = vld [vmem:[#allocation7 + $0x60] sm:$0xff]
    %v246 = vld [vmem:[#allocation7 + $0x68] sm:$0xff]
    %v247 = vld [vmem:[#allocation7 + $0x70] sm:$0xff]
    %v248 = vld [vmem:[#allocation7 + $0x78] sm:$0xff]
    %v249 = vld [vmem:[%s5] sm:$0x1]
    %v250 = vlaneseq
    %v251 = vshrl.u32 %v250, 7
    %v252 = vsub.s32 0, %v251
    %v253 = vrot.slane %v249, %v252
    %254 = vmatprep.subr.mxu0 0.0
    %255 = vmatpush1.msra.mxu0 %v233
    %256 = vmatprep.subr.mxu0 0.0
    %257 = vmatpush1.msra.mxu0 %v234
    %258 = vmatprep.subr.mxu0 0.0
    %259 = vmatpush1.msra.mxu0 %v235
    %260 = vmatprep.subr.mxu0 0.0
    %261 = vmatpush1.msra.mxu0 %v236
    %262 = vmatprep.subr.mxu0 0.0
    %263 = vmatpush1.msra.mxu0 %v237
    %264 = vmatprep.subr.mxu0 0.0
    %265 = vmatpush1.msra.mxu0 %v238
    %266 = vmatprep.subr.mxu0 0.0
    %267 = vmatpush1.msra.mxu0 %v239
    %268 = vmatprep.subr.mxu0 0.0
    %269 = vmatpush1.msra.mxu0 %v240
    %270 = vmatprep.subr.mxu0 0.0
    %271 = vmatpush1.msra.mxu0 %v241
    %272 = vmatprep.subr.mxu0 0.0
    %273 = vmatpush1.msra.mxu0 %v242
    %274 = vmatprep.subr.mxu0 0.0
    %275 = vmatpush1.msra.mxu0 %v243
    %276 = vmatprep.subr.mxu0 0.0
    %277 = vmatpush1.msra.mxu0 %v244
    %278 = vmatprep.subr.mxu0 0.0
    %279 = vmatpush1.msra.mxu0 %v245
    %280 = vmatprep.subr.mxu0 0.0
    %281 = vmatpush1.msra.mxu0 %v246
    %282 = vmatprep.subr.mxu0 0.0
    %283 = vmatpush1.msra.mxu0 %v247
    %284 = vmatprep.subr.mxu0 0.0
    %285 = vmatpush1.msra.mxu0 %v248
    %286 = vmatprep.subr.mxu0 0.0
    %287 = vmatpush1.msra.mxu0 0.0
    %288 = vmatprep.subr.mxu0 0.0
    %289 = vmatpush1.msra.mxu0 0.0
    %290 = vmatprep.subr.mxu0 0.0
    %291 = vmatpush1.msra.mxu0 0.0
    %292 = vmatprep.subr.mxu0 0.0
    %293 = vmatpush1.msra.mxu0 0.0
    %294 = vmatprep.subr.mxu0 0.0
    %295 = vmatpush1.msra.mxu0 0.0
    %296 = vmatprep.subr.mxu0 0.0
    %297 = vmatpush1.msra.mxu0 0.0
    %298 = vmatprep.subr.mxu0 0.0
    %299 = vmatpush1.msra.mxu0 0.0
    %300 = vmatprep.subr.mxu0 0.0
    %301 = vmatpush1.msra.mxu0 0.0
    %302 = vmatprep.subr.mxu0 0.0
    %303 = vmatpush1.msra.mxu0 0.0
    %304 = vmatprep.subr.mxu0 0.0
    %305 = vmatpush1.msra.mxu0 0.0
    %306 = vmatprep.subr.mxu0 0.0
    %307 = vmatpush1.msra.mxu0 0.0
    %308 = vmatprep.subr.mxu0 0.0
    %309 = vmatpush1.msra.mxu0 0.0
    %310 = vmatprep.subr.mxu0 0.0
    %311 = vmatpush1.msra.mxu0 0.0
    %312 = vmatprep.subr.mxu0 0.0
    %313 = vmatpush1.msra.mxu0 0.0
    %314 = vmatprep.subr.mxu0 0.0
    %315 = vmatpush1.msra.mxu0 0.0
    %316 = vmatprep.subr.mxu0 0.0
    %317 = vmatpush1.msra.mxu0 0.0
    %318 = vmatprep.mubr.f32.mxu0 0.0
    %319 = vmatmul.mubr.f32.gmra.mrb[0].mxu0 %v231
    %v320 = vpop.f32.mrb[0].mxu0
    %v321 = vadd.f32 %v253, %v320
    %v322 = vpop.f32.mrb[0].mxu0
    %323 = vmatprep.mubr.f32.mxu0 0.0
    %324 = vmatmul.mubr.f32.gmra.mrb[0].mxu0 %v232
    %v325 = vpop.f32.mrb[0].mxu0
    %v326 = vadd.f32 %v253, %v325
    %v327 = vpop.f32.mrb[0].mxu0
    %328 = vdwg.mxu0
    %v329 = vld [vmem:[%s5 + $0x1] sm:$0x1]
    %v330 = vld [vmem:[%s5 + $0x2] sm:$0x1]
    %331 = vadd.xlane.f32.xlu0 %v321
    %v332 = vpop.xlane.xlu0 %331
    %333 = vadd.xlane.f32.xlu0 %v326
    %v334 = vpop.xlane.xlu0 %333
    %v335 = vmul.f32 %v332, 0.041666668
    %v336 = vmul.f32 %v334, 0.041666668
    %v337 = vsub.f32 %v321, %v335
    %v338 = vsub.f32 %v326, %v336
    %vm339 = vcmp.lt.s32.totalorder %v199, 24
    %v340 = vsel %vm339, 1, 0
    %vm341 = vcmp.eq.s32.totalorder %v340, 1
    %v342 = vsel %vm341, %v337, 0.0
    %v343 = vsel %vm341, %v338, 0.0
    %v344 = vmul.f32 %v342, %v342
    %v345 = vmul.f32 %v343, %v343
    %346 = vadd.xlane.f32.xlu0 %v344
    %v347 = vpop.xlane.xlu0 %346
    %348 = vadd.xlane.f32.xlu0 %v345
    %v349 = vpop.xlane.xlu0 %348
    %v350 = vmul.f32 %v347, 0.041666668
    %v351 = vmul.f32 %v349, 0.041666668
    %v352 = vadd.f32 %v350, 1e-05
    %v353 = vadd.f32 %v351, 1e-05
    %v354 = vrsqrt.pop %v352
    %v355 = vrsqrt.pop %v353
    %v356 = vmul.f32 %v342, %v354
    %v357 = vmul.f32 %v343, %v355
    %v358 = vlaneseq
    %v359 = vshrl.u32 %v358, 7
    %v360 = vsub.s32 0, %v359
    %v361 = vrot.slane %v329, %v360
    %v362 = vmul.f32 %v356, %v361
    %v363 = vmul.f32 %v357, %v361
    %v364 = vlaneseq
    %v365 = vshrl.u32 %v364, 7
    %v366 = vsub.s32 0, %v365
    %v367 = vrot.slane %v330, %v366
    %v368 = vadd.f32 %v362, %v367
    %v369 = vadd.f32 %v363, %v367
    %v370 = vadd.f32 %v368, %v180
    %v371 = vadd.f32 %v369, %v186
    %v372 = vmax.f32 %v370, 0.0
    %v373 = vmax.f32 %v371, 0.0
    %374 = vst [vmem:[#allocation8] sm:$0xff] %v372
    %375 = vst [vmem:[#allocation8 + $0x8] sm:$0xff] %v373
    // Predicated region
    $region38: #{tpu_custom_call.1} parent=1 // pred_check
      _
    $region39: #{tpu_custom_call.1} parent=1 // pred_check_branch
      %377 = sbr.rel (0) target = $region41
    $region40: #{tpu_custom_call.1} parent=1 // pred_region
      %s379 = ssub.s32 256, 256
      %380 = vsyncadd [#allocation4], %s379
      %s381 = sshll.u32 [#allocation8], 4
      %s382 = int_to_ptr.vmem [resolvable:$true] %s381
      %387 = dma.vmem_to_hbm [thread:$0]  %s382, 256, %s6, [#allocation4], 128, 128, 8
    $region41: #{tpu_custom_call.1} parent=1 // pred_fallthru
      _
    // Predicated region
    $region42: #{tpu_custom_call.1} parent=1 // pred_check
      _
    $region43: #{tpu_custom_call.1} parent=1 // pred_check_branch
      %389 = sbr.rel (0) target = $region45
    $region44: #{tpu_custom_call.1} parent=1 // pred_region
      %390 = dma.done [#allocation4], 256
    $region45: #{tpu_custom_call.1} parent=1 // pred_fallthru
      _
    %391 = vsyncpa [#allocation3], 1
    %392 = vsyncpa [#allocation6], 1
    %393 = vsyncpa [#allocation4], 1

</llo_original>
